<compile_context>
chip_gen: v5e
topology: v5e:2x2
jax: 0.10.0
libtpu: 0.0.40
codegen_flags: <defaults>
</compile_context>

<pallas_src>
import functools

import jax
import jax.numpy as jnp
from jax import lax
from jax.experimental import pallas as pl
from jax.experimental.pallas import tpu as pltpu


def _flash_attention_kernel(xq_ref, xkv_ref, wqt_ref, bq_ref, wkvt_ref, bkv_ref,
                            o_ref, m_sc, l_sc, acc_sc):
    """One (batch, query-tile, kv-tile) grid step.  Channel-major shapes:

      xq_ref : (1, C_in, TQ)    query-token slab of x
      xkv_ref: (1, C_in, TKV)   key/value-token slab of x
      wqt_ref: (C_out, C_in)    query weights, pre-transposed, 1/N scale folded in
      bq_ref : (C_out, 1)
      wkvt_ref: (2*C_out, C_in) fused [key; value] weights, pre-transposed
      bkv_ref : (2*C_out, 1)
      o_ref  : (1, C_out, TQ)
      m_sc   : (1, TQ)          running row max        (f32 scratch)
      l_sc   : (1, TQ)          running softmax denom  (f32 scratch)
      acc_sc : (C_out, TQ)      running weighted sum   (f32 scratch)
    """
    kv_i = pl.program_id(2)
    c_out = o_ref.shape[1]

    @pl.when(kv_i == 0)
    def _init():
        m_sc[...] = jnp.full(m_sc.shape, -jnp.inf, m_sc.dtype)
        l_sc[...] = jnp.zeros(l_sc.shape, l_sc.dtype)
        acc_sc[...] = jnp.zeros(acc_sc.shape, acc_sc.dtype)

    x_q = xq_ref[0]       # (C_in, TQ)
    x_kv = xkv_ref[0]     # (C_in, TKV)

    # 1x1 conv == per-token linear projection (channel-major, transpose-free).
    # q[c, i] = sum_ci wq[ci, c] * x_q[ci, i]   (1/N already folded into wq/bq)
    q = jnp.dot(wqt_ref[...], x_q, preferred_element_type=jnp.float32) + bq_ref[...]
    # Fused key|value projection: (2*C_out, TKV), then split along sublanes.
    kv = jnp.dot(wkvt_ref[...], x_kv, preferred_element_type=jnp.float32) + bkv_ref[...]
    k = kv[:c_out, :]     # (C_out, TKV)
    v = kv[c_out:, :]     # (C_out, TKV)

    # Scores in (TKV, TQ) layout: s[j, i] = sum_c k[c, j] * q[c, i].
    # dot_general contraction on dim 0 of both operands -- no explicit .T tile.
    s = lax.dot_general(k, q, (((0,), (0,)), ((), ())),
                        preferred_element_type=jnp.float32)

    # Online softmax over the KV axis (axis 0 of s).
    m_prev = m_sc[...]
    m_new = jnp.maximum(m_prev, jnp.max(s, axis=0, keepdims=True))    # (1, TQ)
    alpha = jnp.exp(m_prev - m_new)                                   # (1, TQ)
    p = jnp.exp(s - m_new)                                            # (TKV, TQ)
    l_sc[...] = alpha * l_sc[...] + jnp.sum(p, axis=0, keepdims=True)
    # acc[c, i] += sum_j v[c, j] * p[j, i]
    acc_sc[...] = alpha * acc_sc[...] + jnp.dot(
        v, p, preferred_element_type=jnp.float32)
    m_sc[...] = m_new

    @pl.when(kv_i == pl.num_programs(2) - 1)
    def _finalize():
        inv_l = pl.reciprocal(l_sc[...], approx=True)                 # (1, TQ)
        o_ref[0] = (acc_sc[...] * inv_l).astype(o_ref.dtype)


def _pick_block(n, requested):
    """Largest block <= requested that divides n and keeps the lane dim a multiple
    of 128 (falls back to a single full-N block otherwise)."""
    b = min(requested, n)
    while b >= 256 and n % b != 0:
        b //= 2
    if b < n and (n % b != 0 or b % 128 != 0):
        # TODO(synk): ragged N would need masked tails; fall back to monolithic.
        b = n
    return b


@functools.partial(jax.jit, static_argnames=("block_q", "block_kv"))
def attention_pallas(x_nchw, wq, bq, wk, bk, wv, bv, *, block_q=128, block_kv=128):
    """x_nchw: (B, C_in, H, W).  wq/wk/wv: (C_in, C_out).  bq/bk/bv: (1, C_out).

    block_q / block_kv are the token-tile sizes; 128 is safe on all generations
    (v5e/v6e/v7x).  Larger tiles (e.g. 512) amortize per-step overhead for big N
    while the flash accumulation keeps VMEM use independent of N.
    """
    B, C_in, H, W = x_nchw.shape
    C_out = wq.shape[1]
    assert C_out == C_in, "view_as(x) in the PyTorch module requires C_out == C_in"
    N = H * W

    tq = _pick_block(N, block_q)
    tkv = _pick_block(N, block_kv)

    # Channel-major tokens: a free reshape of NCHW -- no HBM transpose.
    x_cm = x_nchw.reshape(B, C_in, N)

    # Fold the 1/N score scale into the query projection (exact: scale is linear),
    # pre-transpose weights to (C_out, C_in) so all projections are standard dots.
    scale = 1.0 / float(N)
    wq_t = (wq * scale).T                                            # (C_out, C_in)
    bq_col = bq.reshape(C_out, 1) * scale                            # (C_out, 1)
    # Fused key|value projection parameters.
    w_kv_t = jnp.concatenate([wk.T, wv.T], axis=0)                   # (2*C_out, C_in)
    b_kv_col = jnp.concatenate(
        [bk.reshape(C_out, 1), bv.reshape(C_out, 1)], axis=0)        # (2*C_out, 1)

    grid = (B, N // tq, N // tkv)

    out_cm = pl.pallas_call(
        _flash_attention_kernel,
        out_shape=jax.ShapeDtypeStruct((B, C_out, N), x_nchw.dtype),
        grid_spec=pltpu.PrefetchScalarGridSpec(
            num_scalar_prefetch=0,
            grid=grid,
            in_specs=[
                pl.BlockSpec((1, C_in, tq), lambda b, qi, ki: (b, 0, qi)),
                pl.BlockSpec((1, C_in, tkv), lambda b, qi, ki: (b, 0, ki)),
                pl.BlockSpec((C_out, C_in), lambda b, qi, ki: (0, 0)),
                pl.BlockSpec((C_out, 1), lambda b, qi, ki: (0, 0)),
                pl.BlockSpec((2 * C_out, C_in), lambda b, qi, ki: (0, 0)),
                pl.BlockSpec((2 * C_out, 1), lambda b, qi, ki: (0, 0)),
            ],
            out_specs=pl.BlockSpec((1, C_out, tq), lambda b, qi, ki: (b, 0, qi)),
            scratch_shapes=[
                pltpu.VMEM((1, tq), jnp.float32),       # running max
                pltpu.VMEM((1, tq), jnp.float32),       # running denom
                pltpu.VMEM((C_out, tq), jnp.float32),   # running accumulator
            ],
        ),
        compiler_params=pltpu.CompilerParams(
            dimension_semantics=("parallel", "parallel", "arbitrary"),
        ),
    )(x_cm, x_cm, wq_t, bq_col, w_kv_t, b_kv_col)

    # (B, C_out, N) -> NCHW is again a free reshape (view_as(x), C_out == C_in).
    return out_cm.reshape(B, C_out, H, W)


def attention_reference(x_nchw, wq, bq, wk, bk, wv, bv):
    """Pure-JAX reference mirroring the PyTorch forward exactly."""
    B, C_in, H, W = x_nchw.shape
    N = H * W
    x = x_nchw.reshape(B, C_in, N).astype(jnp.float32)               # (B, C_in, N)
    # 1x1 conv: out[b, co, n] = sum_ci w[ci, co] * x[b, ci, n] + b[co]
    q = jnp.einsum("io,bin->bon", wq, x) + bq.reshape(1, -1, 1)
    k = jnp.einsum("io,bin->bon", wk, x) + bk.reshape(1, -1, 1)
    v = jnp.einsum("io,bin->bon", wv, x) + bv.reshape(1, -1, 1)
    attn = jnp.einsum("bci,bcj->bij", q, k) / N
    attn = jax.nn.softmax(attn, axis=-1)
    out = jnp.einsum("bcj,bij->bci", v, attn)                        # v @ attn^T
    return out.reshape(B, -1, H, W).astype(x_nchw.dtype)


if __name__ == "__main__":
    key = jax.random.PRNGKey(0)
    B, C, H, W = 2, 4, 16, 16          # in_channels == out_channels so view_as(x) is valid
    kx, kq, kbq, kk, kbk, kv, kbv = jax.random.split(key, 7)

    x = jax.random.normal(kx, (B, C, H, W), dtype=jnp.float32)

    # Deterministic synthetic parameters (Conv2d weight (C_out, C_in, 1, 1) stored
    # here directly in (C_in, C_out) matmul layout).
    scale = 1.0 / jnp.sqrt(C)
    wq = jax.random.uniform(kq, (C, C), minval=-scale, maxval=scale, dtype=jnp.float32)
    bq = jax.random.uniform(kbq, (1, C), minval=-scale, maxval=scale, dtype=jnp.float32)
    wk = jax.random.uniform(kk, (C, C), minval=-scale, maxval=scale, dtype=jnp.float32)
    bk = jax.random.uniform(kbk, (1, C), minval=-scale, maxval=scale, dtype=jnp.float32)
    wv = jax.random.uniform(kv, (C, C), minval=-scale, maxval=scale, dtype=jnp.float32)
    bv = jax.random.uniform(kbv, (1, C), minval=-scale, maxval=scale, dtype=jnp.float32)

    out = attention_pallas(x, wq, bq, wk, bk, wv, bv)     # N=256 -> grid (2, 2, 2)
    out = jax.block_until_ready(out)

    ref = attention_reference(x, wq, bq, wk, bk, wv, bv)
    assert out.shape == x.shape, (out.shape, x.shape)
    # Tolerance covers the approx (EUP) reciprocal in the softmax normalization
    # and the online-softmax reordering; real bugs would show up as O(1) errors.
    assert jnp.allclose(out, ref, atol=2e-3, rtol=2e-3), float(jnp.max(jnp.abs(out - ref)))

    print("KERNEL_OK")
</pallas_src>

<mosaic_0001>
module attributes {stable_mosaic.version = 11 : i64} {
  func.func @_flash_attention_kernel(%arg0: i32, %arg1: i32, %arg2: i32, %arg3: memref<1x4x128xf32, #tpu.memory_space<vmem>>, %arg4: memref<1x4x128xf32, #tpu.memory_space<vmem>>, %arg5: memref<4x4xf32, #tpu.memory_space<vmem>>, %arg6: memref<4x1xf32, #tpu.memory_space<vmem>>, %arg7: memref<8x4xf32, #tpu.memory_space<vmem>>, %arg8: memref<8x1xf32, #tpu.memory_space<vmem>>, %arg9: memref<1x4x128xf32, #tpu.memory_space<vmem>>, %arg10: memref<1x128xf32, #tpu.memory_space<vmem>>, %arg11: memref<1x128xf32, #tpu.memory_space<vmem>>, %arg12: memref<4x128xf32, #tpu.memory_space<vmem>>) attributes {dimension_semantics = [#tpu.dimension_semantics<parallel>, #tpu.dimension_semantics<parallel>, #tpu.dimension_semantics<arbitrary>], iteration_bounds = array<i64: 2, 2, 2>, scalar_prefetch = 0 : i64, scratch_operands = 3 : i64, tpu.core_type = #tpu.core_type<tc>, window_params = [{transform_indices = @transform_0, window_bounds = array<i64: 1, 4, 128>}, {transform_indices = @transform_1, window_bounds = array<i64: 1, 4, 128>}, {pipeline_mode = #tpu.pipeline_mode<synchronous>, transform_indices = @transform_2, window_bounds = array<i64: 4, 4>}, {pipeline_mode = #tpu.pipeline_mode<synchronous>, transform_indices = @transform_3, window_bounds = array<i64: 4, 1>}, {pipeline_mode = #tpu.pipeline_mode<synchronous>, transform_indices = @transform_4, window_bounds = array<i64: 8, 4>}, {pipeline_mode = #tpu.pipeline_mode<synchronous>, transform_indices = @transform_5, window_bounds = array<i64: 8, 1>}, {transform_indices = @transform_6, window_bounds = array<i64: 1, 4, 128>}]} {
    %c0_i32 = arith.constant 0 : i32
    %0 = arith.cmpi eq, %arg2, %c0_i32 : i32
    %1 = arith.extui %0 : i1 to i32
    %c0_i32_0 = arith.constant 0 : i32
    %2 = arith.cmpi ne, %1, %c0_i32_0 : i32
    scf.if %2 {
      %cst_32 = arith.constant 0xFF800000 : f32
      %45 = vector.broadcast %cst_32 : f32 to vector<1x128xf32>
      %c0_33 = arith.constant 0 : index
      %c0_34 = arith.constant 0 : index
      %46 = vector.load %arg10[%c0_33, %c0_34] : memref<1x128xf32, #tpu.memory_space<vmem>>, vector<1x128xf32>
      tpu.vector_store %arg10[%c0_33, %c0_34], %45 {strides = array<i32>} : memref<1x128xf32, #tpu.memory_space<vmem>>, vector<1x128xf32>,
      %cst_35 = arith.constant 0.000000e+00 : f32
      %47 = vector.broadcast %cst_35 : f32 to vector<1x128xf32>
      %c0_36 = arith.constant 0 : index
      %c0_37 = arith.constant 0 : index
      %48 = vector.load %arg11[%c0_36, %c0_37] : memref<1x128xf32, #tpu.memory_space<vmem>>, vector<1x128xf32>
      tpu.vector_store %arg11[%c0_36, %c0_37], %47 {strides = array<i32>} : memref<1x128xf32, #tpu.memory_space<vmem>>, vector<1x128xf32>,
      %cst_38 = arith.constant 0.000000e+00 : f32
      %49 = vector.broadcast %cst_38 : f32 to vector<4x128xf32>
      %c0_39 = arith.constant 0 : index
      %c0_40 = arith.constant 0 : index
      %50 = vector.load %arg12[%c0_39, %c0_40] : memref<4x128xf32, #tpu.memory_space<vmem>>, vector<4x128xf32>
      tpu.vector_store %arg12[%c0_39, %c0_40], %49 {strides = array<i32>} : memref<4x128xf32, #tpu.memory_space<vmem>>, vector<4x128xf32>,
    } else {
    }
    %c0 = arith.constant 0 : index
    %c0_1 = arith.constant 0 : index
    %c0_2 = arith.constant 0 : index
    %3 = vector.load %arg3[%c0, %c0_1, %c0_2] : memref<1x4x128xf32, #tpu.memory_space<vmem>>, vector<1x4x128xf32>
    %4 = vector.shape_cast %3 : vector<1x4x128xf32> to vector<4x128xf32>
    %c0_3 = arith.constant 0 : index
    %c0_4 = arith.constant 0 : index
    %c0_5 = arith.constant 0 : index
    %5 = vector.load %arg4[%c0_3, %c0_4, %c0_5] : memref<1x4x128xf32, #tpu.memory_space<vmem>>, vector<1x4x128xf32>
    %6 = vector.shape_cast %5 : vector<1x4x128xf32> to vector<4x128xf32>
    %c0_6 = arith.constant 0 : index
    %c0_7 = arith.constant 0 : index
    %7 = vector.load %arg5[%c0_6, %c0_7] : memref<4x4xf32, #tpu.memory_space<vmem>>, vector<4x4xf32>
    %cst = arith.constant dense<0.000000e+00> : vector<4x128xf32>
    %8 = tpu.matmul %7, %4, %cst {dimension_numbers = #tpu.dot_dimension_numbers<[1], [0], [0], [1], [0, 0, 1, 1], [], []>} : vector<4x4xf32>, vector<4x128xf32>, vector<4x128xf32> -> vector<4x128xf32>
    %c0_8 = arith.constant 0 : index
    %c0_9 = arith.constant 0 : index
    %9 = vector.load %arg6[%c0_8, %c0_9] : memref<4x1xf32, #tpu.memory_space<vmem>>, vector<4x1xf32>
    %10 = vector.broadcast %9 : vector<4x1xf32> to vector<4x128xf32>
    %11 = arith.addf %8, %10 : vector<4x128xf32>
    %c0_10 = arith.constant 0 : index
    %c0_11 = arith.constant 0 : index
    %12 = vector.load %arg7[%c0_10, %c0_11] : memref<8x4xf32, #tpu.memory_space<vmem>>, vector<8x4xf32>
    %cst_12 = arith.constant dense<0.000000e+00> : vector<8x128xf32>
    %13 = tpu.matmul %12, %6, %cst_12 {dimension_numbers = #tpu.dot_dimension_numbers<[1], [0], [0], [1], [0, 0, 1, 1], [], []>} : vector<8x4xf32>, vector<4x128xf32>, vector<8x128xf32> -> vector<8x128xf32>
    %c0_13 = arith.constant 0 : index
    %c0_14 = arith.constant 0 : index
    %14 = vector.load %arg8[%c0_13, %c0_14] : memref<8x1xf32, #tpu.memory_space<vmem>>, vector<8x1xf32>
    %15 = vector.broadcast %14 : vector<8x1xf32> to vector<8x128xf32>
    %16 = arith.addf %13, %15 : vector<8x128xf32>
    %17 = vector.extract_strided_slice %16 {offsets = [0, 0], sizes = [4, 128], strides = [1, 1]} : vector<8x128xf32> to vector<4x128xf32>
    %18 = vector.extract_strided_slice %16 {offsets = [4, 0], sizes = [4, 128], strides = [1, 1]} : vector<8x128xf32> to vector<4x128xf32>
    %cst_15 = arith.constant dense<0.000000e+00> : vector<128x128xf32>
    %19 = tpu.matmul %17, %11, %cst_15 {dimension_numbers = #tpu.dot_dimension_numbers<[0], [0], [1], [1], [0, 1, 1, 1], [], []>} : vector<4x128xf32>, vector<4x128xf32>, vector<128x128xf32> -> vector<128x128xf32>
    %c0_16 = arith.constant 0 : index
    %c0_17 = arith.constant 0 : index
    %20 = vector.load %arg10[%c0_16, %c0_17] : memref<1x128xf32, #tpu.memory_space<vmem>>, vector<1x128xf32>
    %cst_18 = arith.constant dense<0xFF800000> : vector<128xf32>
    %21 = vector.multi_reduction <maximumf>, %19, %cst_18 [0] : vector<128x128xf32> to vector<128xf32>
    %22 = vector.shape_cast %21 : vector<128xf32> to vector<1x128xf32>
    %23 = arith.maximumf %20, %22 : vector<1x128xf32>
    %24 = arith.subf %20, %23 : vector<1x128xf32>
    %25 = math.exp %24 : vector<1x128xf32>
    %26 = vector.broadcast %23 : vector<1x128xf32> to vector<128x128xf32>
    %27 = arith.subf %19, %26 : vector<128x128xf32>
    %28 = math.exp %27 : vector<128x128xf32>
    %c0_19 = arith.constant 0 : index
    %c0_20 = arith.constant 0 : index
    %29 = vector.load %arg11[%c0_19, %c0_20] : memref<1x128xf32, #tpu.memory_space<vmem>>, vector<1x128xf32>
    %30 = arith.mulf %25, %29 : vector<1x128xf32>
    %cst_21 = arith.constant dense<0.000000e+00> : vector<128xf32>
    %31 = vector.multi_reduction <add>, %28, %cst_21 [0] : vector<128x128xf32> to vector<128xf32>
    %32 = vector.shape_cast %31 : vector<128xf32> to vector<1x128xf32>
    %33 = arith.addf %30, %32 : vector<1x128xf32>
    %c0_22 = arith.constant 0 : index
    %c0_23 = arith.constant 0 : index
    %34 = vector.load %arg11[%c0_22, %c0_23] : memref<1x128xf32, #tpu.memory_space<vmem>>, vector<1x128xf32>
    tpu.vector_store %arg11[%c0_22, %c0_23], %33 {strides = array<i32>} : memref<1x128xf32, #tpu.memory_space<vmem>>, vector<1x128xf32>,
    %c0_24 = arith.constant 0 : index
    %c0_25 = arith.constant 0 : index
    %35 = vector.load %arg12[%c0_24, %c0_25] : memref<4x128xf32, #tpu.memory_space<vmem>>, vector<4x128xf32>
    %36 = vector.broadcast %25 : vector<1x128xf32> to vector<4x128xf32>
    %37 = arith.mulf %36, %35 : vector<4x128xf32>
    %cst_26 = arith.constant dense<0.000000e+00> : vector<4x128xf32>
    %38 = tpu.matmul %18, %28, %cst_26 {dimension_numbers = #tpu.dot_dimension_numbers<[1], [0], [0], [1], [0, 0, 1, 1], [], []>} : vector<4x128xf32>, vector<128x128xf32>, vector<4x128xf32> -> vector<4x128xf32>
    %39 = arith.addf %37, %38 : vector<4x128xf32>
    %c0_27 = arith.constant 0 : index
    %c0_28 = arith.constant 0 : index
    %40 = vector.load %arg12[%c0_27, %c0_28] : memref<4x128xf32, #tpu.memory_space<vmem>>, vector<4x128xf32>
    tpu.vector_store %arg12[%c0_27, %c0_28], %39 {strides = array<i32>} : memref<4x128xf32, #tpu.memory_space<vmem>>, vector<4x128xf32>,
    %c0_29 = arith.constant 0 : index
    %c0_30 = arith.constant 0 : index
    %41 = vector.load %arg10[%c0_29, %c0_30] : memref<1x128xf32, #tpu.memory_space<vmem>>, vector<1x128xf32>
    tpu.vector_store %arg10[%c0_29, %c0_30], %23 {strides = array<i32>} : memref<1x128xf32, #tpu.memory_space<vmem>>, vector<1x128xf32>,
    %c1_i32 = arith.constant 1 : i32
    %42 = arith.cmpi eq, %arg2, %c1_i32 : i32
    %43 = arith.extui %42 : i1 to i32
    %c0_i32_31 = arith.constant 0 : i32
    %44 = arith.cmpi ne, %43, %c0_i32_31 : i32
    scf.if %44 {
      %c0_32 = arith.constant 0 : index
      %c0_33 = arith.constant 0 : index
      %45 = vector.load %arg11[%c0_32, %c0_33] : memref<1x128xf32, #tpu.memory_space<vmem>>, vector<1x128xf32>
      %46 = tpu.reciprocal %45 {approx = true} : vector<1x128xf32> -> vector<1x128xf32>
      %c0_34 = arith.constant 0 : index
      %c0_35 = arith.constant 0 : index
      %47 = vector.load %arg12[%c0_34, %c0_35] : memref<4x128xf32, #tpu.memory_space<vmem>>, vector<4x128xf32>
      %48 = vector.broadcast %46 : vector<1x128xf32> to vector<4x128xf32>
      %49 = arith.mulf %47, %48 : vector<4x128xf32>
      %c0_36 = arith.constant 0 : index
      %c0_37 = arith.constant 0 : index
      %c0_38 = arith.constant 0 : index
      %50 = vector.load %arg9[%c0_36, %c0_37, %c0_38] : memref<1x4x128xf32, #tpu.memory_space<vmem>>, vector<1x4x128xf32>
      %51 = vector.shape_cast %50 : vector<1x4x128xf32> to vector<4x128xf32>
      %52 = vector.shape_cast %49 : vector<4x128xf32> to vector<1x4x128xf32>
      tpu.vector_store %arg9[%c0_36, %c0_37, %c0_38], %52 {strides = array<i32>} : memref<1x4x128xf32, #tpu.memory_space<vmem>>, vector<1x4x128xf32>,
    } else {
    }
    return
  }
  func.func @transform_0(%arg0: i32, %arg1: i32, %arg2: i32) -> (i32, i32, i32) {
    %c0_i32 = arith.constant 0 : i32
    %c0_i32_0 = arith.constant 0 : i32
    return %arg0, %c0_i32, %arg1 : i32, i32, i32
  }
  func.func @transform_1(%arg0: i32, %arg1: i32, %arg2: i32) -> (i32, i32, i32) {
    %c0_i32 = arith.constant 0 : i32
    %c0_i32_0 = arith.constant 0 : i32
    return %arg0, %c0_i32, %arg2 : i32, i32, i32
  }
  func.func @transform_2(%arg0: i32, %arg1: i32, %arg2: i32) -> (i32, i32) {
    %c0_i32 = arith.constant 0 : i32
    %c0_i32_0 = arith.constant 0 : i32
    %c0_i32_1 = arith.constant 0 : i32
    return %c0_i32, %c0_i32_0 : i32, i32
  }
  func.func @transform_3(%arg0: i32, %arg1: i32, %arg2: i32) -> (i32, i32) {
    %c0_i32 = arith.constant 0 : i32
    %c0_i32_0 = arith.constant 0 : i32
    %c0_i32_1 = arith.constant 0 : i32
    return %c0_i32, %c0_i32_0 : i32, i32
  }
  func.func @transform_4(%arg0: i32, %arg1: i32, %arg2: i32) -> (i32, i32) {
    %c0_i32 = arith.constant 0 : i32
    %c0_i32_0 = arith.constant 0 : i32
    %c0_i32_1 = arith.constant 0 : i32
    return %c0_i32, %c0_i32_0 : i32, i32
  }
  func.func @transform_5(%arg0: i32, %arg1: i32, %arg2: i32) -> (i32, i32) {
    %c0_i32 = arith.constant 0 : i32
    %c0_i32_0 = arith.constant 0 : i32
    %c0_i32_1 = arith.constant 0 : i32
    return %c0_i32, %c0_i32_0 : i32, i32
  }
  func.func @transform_6(%arg0: i32, %arg1: i32, %arg2: i32) -> (i32, i32, i32) {
    %c0_i32 = arith.constant 0 : i32
    %c0_i32_0 = arith.constant 0 : i32
    return %arg0, %c0_i32, %arg1 : i32, i32, i32
  }
}

</mosaic_0001>

<llo_original>
// kernel: attention_pallas.1
$region0: #{attention_pallas.1}
  #allocation0 [shape = 'u32[]', space=smem, size = 0x4, offset = 0x4, fixed_abs, tag = 'smem constant byte address 0x4 - core index']
  #allocation1 [shape = 'u32[72,128]{1,0:T(1,128)}', space=vmem, size = 0x9000, scoped, tag = 'internal scratch']
  #allocation2 [shape = 'f32[1,128]{1,0:T(1,128)}', space=vmem, size = 0x200, scoped, tag = 'scratch operand']
  #allocation3 [shape = 'f32[1,128]{1,0:T(1,128)}', space=vmem, size = 0x200, scoped, tag = 'scratch operand']
  #allocation4 [shape = 'f32[4,128]{1,0:T(4,128)}', space=vmem, size = 0x800, scoped, tag = 'scratch operand']
  %s0 = inlined_call_operand.vmem [shape: f32[2,4,256], index: 0, kind: input, shape index: {}, may-alias: {0,1}]
  %s1 = inlined_call_operand.vmem [shape: f32[2,4,256], index: 1, kind: input, shape index: {}, may-alias: {0,1}]
  %s2 = inlined_call_operand.vmem [shape: f32[4,4], index: 2, kind: input, shape index: {}]
  %s3 = inlined_call_operand.vmem [shape: f32[4,1], index: 3, kind: input, shape index: {}]
  %s4 = inlined_call_operand.vmem [shape: f32[8,4], index: 4, kind: input, shape index: {}]
  %s5 = inlined_call_operand.vmem [shape: f32[8,1], index: 5, kind: input, shape index: {}]
  %s6 = inlined_call_operand.vmem [shape: f32[2,4,256], index: 6, kind: output, shape index: {}]
  %s7 = sld [smem:[#allocation0]]
  $region65: #{attention_pallas.1} parent=0
    _
  %s9 = ssub.s32 1, %s7
  %s10 = scalar_select 0, %s9, %s7
  loop: start=0, step=1, limit=10
  $region2: #{attention_pallas.1} parent=0 // loop_pre_header
    _
  $region3: #{attention_pallas.1} parent=0 // loop_header
    %s12 = sphi 0, %s16
    %p13 = scmp.ge.s32.totalorder %s12, 10
    %s19 = sphi 0, %s38
    %s20 = sphi 0, %s34
    %s21 = sphi 0, %s30
    %s22 = sphi 0, %s19
    %s23 = sphi 0, %s20
    %s24 = sphi 0, %s21
    %s25 = sphi 0, %s22
    %s26 = sphi 0, %s23
    %s27 = sphi 0, %s24
    %s43 = sphi 0, %s45
    %s46 = sphi 0, %s43
    %s47 = sphi 0, %s46
    %s63 = sphi 0, %s47
    %s71 = sphi 0, %s73
    %s74 = sphi 0, %s71
    %s75 = sphi 0, %s74
    %s91 = sphi 0, %s75
    %s95 = sphi 0, %s95
    %s97 = sphi 0, %s95
    %s98 = sphi 0, %s97
    %s112 = sphi 0, %s98
    %s116 = sphi 0, %s116
    %s118 = sphi 0, %s116
    %s119 = sphi 0, %s118
    %s133 = sphi 0, %s119
    %s137 = sphi 0, %s137
    %s139 = sphi 0, %s137
    %s140 = sphi 0, %s139
    %s154 = sphi 0, %s140
    %s158 = sphi 0, %s158
    %s160 = sphi 0, %s158
    %s161 = sphi 0, %s160
    %s175 = sphi 0, %s161
    %s183 = sphi 0, %s185
    %s186 = sphi 0, %s183
    %s187 = sphi 0, %s186
    %s203 = sphi 0, %s187
  $region4: #{attention_pallas.1} parent=0 // loop_header_branch
    %15 = sbr.rel (%p13) target = $region8
  $region5: #{attention_pallas.1} parent=0 // loop_body
    %s17 = ssub.s32 %s12, 1
    %s18 = ssub.s32 %s12, 2
    %s28 = sadd.s32 1, %s21
    %p29 = scmp.ge.s32.totalorder %s28, 2
    %s30 = scalar_select %p29, 0, %s28
    %s31 = sadd.s32 1, %s20
    %s32 = scalar_select %p29, %s31, %s20
    %p33 = scmp.ge.s32.totalorder %s32, 2
    %s34 = scalar_select %p33, 0, %s32
    %s35 = sadd.s32 1, %s19
    %s36 = scalar_select %p33, %s35, %s19
    %p37 = scmp.ge.s32.totalorder %s36, 2
    %s38 = scalar_select %p37, 0, %s36
    %s39 = ssub.s32 %s19, %s38
    %s40 = ssub.s32 %s20, %s34
    %s41 = sor.u32 %s39, %s40
    %p42 = scmp.eq.s32.totalorder %s41, 0
    %s44 = sadd.s32 %s43, 1
    %s45 = scalar_select %p42, %s43, %s44
    %p48 = pneg %p42
    %p49 = scmp.eq.s32.totalorder %s12, 7
    %p50 = por %p48, %p49
    %p51 = scmp.ne.s32.totalorder %s43, %s46
    %p52 = scmp.eq.s32.totalorder %s12, 0
    %p53 = por %p51, %p52
    %p54 = scmp.ne.s32.totalorder %s43, %s46
    %p55 = scmp.eq.s32.totalorder %s17, 7
    %p56 = por %p54, %p55
    %p57 = scmp.ne.s32.totalorder %s46, %s47
    %p58 = scmp.eq.s32.totalorder %s17, 0
    %p59 = por %p57, %p58
    %p60 = scmp.ne.s32.totalorder %s46, %s47
    %p61 = scmp.eq.s32.totalorder %s18, 7
    %p62 = por %p60, %p61
    %p64 = scmp.ne.s32.totalorder %s47, %s63
    %p65 = scmp.eq.s32.totalorder %s18, 0
    %p66 = por %p64, %p65
    %s67 = ssub.s32 %s19, %s38
    %s68 = ssub.s32 %s21, %s30
    %s69 = sor.u32 %s67, %s68
    %p70 = scmp.eq.s32.totalorder %s69, 0
    %s72 = sadd.s32 %s71, 1
    %s73 = scalar_select %p70, %s71, %s72
    %p76 = pneg %p70
    %p77 = scmp.eq.s32.totalorder %s12, 7
    %p78 = por %p76, %p77
    %p79 = scmp.ne.s32.totalorder %s71, %s74
    %p80 = scmp.eq.s32.totalorder %s12, 0
    %p81 = por %p79, %p80
    %p82 = scmp.ne.s32.totalorder %s71, %s74
    %p83 = scmp.eq.s32.totalorder %s17, 7
    %p84 = por %p82, %p83
    %p85 = scmp.ne.s32.totalorder %s74, %s75
    %p86 = scmp.eq.s32.totalorder %s17, 0
    %p87 = por %p85, %p86
    %p88 = scmp.ne.s32.totalorder %s74, %s75
    %p89 = scmp.eq.s32.totalorder %s18, 7
    %p90 = por %p88, %p89
    %p92 = scmp.ne.s32.totalorder %s75, %s91
    %p93 = scmp.eq.s32.totalorder %s18, 0
    %p94 = por %p92, %p93
    %s96 = sadd.s32 %s95, 1
    %p99 = scmp.eq.s32.totalorder %s12, 7
    %p100 = scmp.ne.s32.totalorder %s95, %s97
    %p101 = scmp.eq.s32.totalorder %s12, 0
    %p102 = por %p100, %p101
    %p103 = scmp.ne.s32.totalorder %s95, %s97
    %p104 = scmp.eq.s32.totalorder %s17, 7
    %p105 = por %p103, %p104
    %p106 = scmp.ne.s32.totalorder %s97, %s98
    %p107 = scmp.eq.s32.totalorder %s17, 0
    %p108 = por %p106, %p107
    %p109 = scmp.ne.s32.totalorder %s97, %s98
    %p110 = scmp.eq.s32.totalorder %s18, 7
    %p111 = por %p109, %p110
    %p113 = scmp.ne.s32.totalorder %s98, %s112
    %p114 = scmp.eq.s32.totalorder %s18, 0
    %p115 = por %p113, %p114
    %s117 = sadd.s32 %s116, 1
    %p120 = scmp.eq.s32.totalorder %s12, 7
    %p121 = scmp.ne.s32.totalorder %s116, %s118
    %p122 = scmp.eq.s32.totalorder %s12, 0
    %p123 = por %p121, %p122
    %p124 = scmp.ne.s32.totalorder %s116, %s118
    %p125 = scmp.eq.s32.totalorder %s17, 7
    %p126 = por %p124, %p125
    %p127 = scmp.ne.s32.totalorder %s118, %s119
    %p128 = scmp.eq.s32.totalorder %s17, 0
    %p129 = por %p127, %p128
    %p130 = scmp.ne.s32.totalorder %s118, %s119
    %p131 = scmp.eq.s32.totalorder %s18, 7
    %p132 = por %p130, %p131
    %p134 = scmp.ne.s32.totalorder %s119, %s133
    %p135 = scmp.eq.s32.totalorder %s18, 0
    %p136 = por %p134, %p135
    %s138 = sadd.s32 %s137, 1
    %p141 = scmp.eq.s32.totalorder %s12, 7
    %p142 = scmp.ne.s32.totalorder %s137, %s139
    %p143 = scmp.eq.s32.totalorder %s12, 0
    %p144 = por %p142, %p143
    %p145 = scmp.ne.s32.totalorder %s137, %s139
    %p146 = scmp.eq.s32.totalorder %s17, 7
    %p147 = por %p145, %p146
    %p148 = scmp.ne.s32.totalorder %s139, %s140
    %p149 = scmp.eq.s32.totalorder %s17, 0
    %p150 = por %p148, %p149
    %p151 = scmp.ne.s32.totalorder %s139, %s140
    %p152 = scmp.eq.s32.totalorder %s18, 7
    %p153 = por %p151, %p152
    %p155 = scmp.ne.s32.totalorder %s140, %s154
    %p156 = scmp.eq.s32.totalorder %s18, 0
    %p157 = por %p155, %p156
    %s159 = sadd.s32 %s158, 1
    %p162 = scmp.eq.s32.totalorder %s12, 7
    %p163 = scmp.ne.s32.totalorder %s158, %s160
    %p164 = scmp.eq.s32.totalorder %s12, 0
    %p165 = por %p163, %p164
    %p166 = scmp.ne.s32.totalorder %s158, %s160
    %p167 = scmp.eq.s32.totalorder %s17, 7
    %p168 = por %p166, %p167
    %p169 = scmp.ne.s32.totalorder %s160, %s161
    %p170 = scmp.eq.s32.totalorder %s17, 0
    %p171 = por %p169, %p170
    %p172 = scmp.ne.s32.totalorder %s160, %s161
    %p173 = scmp.eq.s32.totalorder %s18, 7
    %p174 = por %p172, %p173
    %p176 = scmp.ne.s32.totalorder %s161, %s175
    %p177 = scmp.eq.s32.totalorder %s18, 0
    %p178 = por %p176, %p177
    %s179 = ssub.s32 %s19, %s38
    %s180 = ssub.s32 %s20, %s34
    %s181 = sor.u32 %s179, %s180
    %p182 = scmp.eq.s32.totalorder %s181, 0
    %s184 = sadd.s32 %s183, 1
    %s185 = scalar_select %p182, %s183, %s184
    %p188 = pneg %p182
    %p189 = scmp.eq.s32.totalorder %s12, 7
    %p190 = por %p188, %p189
    %p191 = scmp.ne.s32.totalorder %s183, %s186
    %p192 = scmp.eq.s32.totalorder %s12, 0
    %p193 = por %p191, %p192
    %p194 = scmp.ne.s32.totalorder %s183, %s186
    %p195 = scmp.eq.s32.totalorder %s17, 7
    %p196 = por %p194, %p195
    %p197 = scmp.ne.s32.totalorder %s186, %s187
    %p198 = scmp.eq.s32.totalorder %s17, 0
    %p199 = por %p197, %p198
    %p200 = scmp.ne.s32.totalorder %s186, %s187
    %p201 = scmp.eq.s32.totalorder %s18, 7
    %p202 = por %p200, %p201
    %p204 = scmp.ne.s32.totalorder %s187, %s203
    %p205 = scmp.eq.s32.totalorder %s18, 0
    %p206 = por %p204, %p205
    %p207 = scmp.le.s32.totalorder 1, %s12
    %p208 = scmp.lt.s32.totalorder %s12, 9
    %p209 = pnand %p207, %p208
    %p210 = pneg %p209
    // Predicated region
    $region9: #{attention_pallas.1} parent=5 // pred_check
      _
    $region10: #{attention_pallas.1} parent=5 // pred_check_branch
      %212 = sbr.rel (%p209) target = $region12
    $region11: #{attention_pallas.1} parent=5 // pred_region
      %s213 = ssub.s32 %s12, 1
      // Predicated region
      $region13: #{attention_pallas.1} parent=11 // pred_check
        %p214 = pneg %p108
      $region14: #{attention_pallas.1} parent=11 // pred_check_branch
        %216 = sbr.rel (%p214) target = $region16
      $region15: #{attention_pallas.1} parent=11 // pred_region
        _
      $region16: #{attention_pallas.1} parent=11 // pred_fallthru
        _
      // Predicated region
      $region17: #{attention_pallas.1} parent=11 // pred_check
        %p217 = pneg %p129
      $region18: #{attention_pallas.1} parent=11 // pred_check_branch
        %219 = sbr.rel (%p217) target = $region20
      $region19: #{attention_pallas.1} parent=11 // pred_region
        _
      $region20: #{attention_pallas.1} parent=11 // pred_fallthru
        _
      // Predicated region
      $region21: #{attention_pallas.1} parent=11 // pred_check
        %p220 = pneg %p150
      $region22: #{attention_pallas.1} parent=11 // pred_check_branch
        %222 = sbr.rel (%p220) target = $region24
      $region23: #{attention_pallas.1} parent=11 // pred_region
        _
      $region24: #{attention_pallas.1} parent=11 // pred_fallthru
        _
      // Predicated region
      $region25: #{attention_pallas.1} parent=11 // pred_check
        %p223 = pneg %p171
      $region26: #{attention_pallas.1} parent=11 // pred_check_branch
        %225 = sbr.rel (%p223) target = $region28
      $region27: #{attention_pallas.1} parent=11 // pred_region
        _
      $region28: #{attention_pallas.1} parent=11 // pred_fallthru
        _
    $region12: #{attention_pallas.1} parent=5 // pred_fallthru
      _
    %p226 = scmp.lt.s32.totalorder %s12, 8
    // Predicated region
    $region29: #{attention_pallas.1} parent=5 // pred_check
      %p227 = pneg %p226
    $region30: #{attention_pallas.1} parent=5 // pred_check_branch
      %229 = sbr.rel (%p227) target = $region32
    $region31: #{attention_pallas.1} parent=5 // pred_region
      // Predicated region
      $region33: #{attention_pallas.1} parent=31 // pred_check
        %p230 = pneg %p53
      $region34: #{attention_pallas.1} parent=31 // pred_check_branch
        %232 = sbr.rel (%p230) target = $region36
      $region35: #{attention_pallas.1} parent=31 // pred_region
        %p233 = scmp.lt.s32.totalorder %s19, 1
        %s234 = scalar_select %p233, %s19, 1
        %p235 = scmp.lt.s32.totalorder %s20, 1
        %s236 = scalar_select %p235, %s20, 1
        %s237 = smul.addr %s234, 2
        %s238 = sadd.s32 %s236, %s237
        %s239 = smul.addr %s238, 4
        %s240 = scalar_lea.vmem %s0, %s239
      $region36: #{attention_pallas.1} parent=31 // pred_fallthru
        _
      // Predicated region
      $region37: #{attention_pallas.1} parent=31 // pred_check
        %p241 = pneg %p81
      $region38: #{attention_pallas.1} parent=31 // pred_check_branch
        %243 = sbr.rel (%p241) target = $region40
      $region39: #{attention_pallas.1} parent=31 // pred_region
        %p244 = scmp.lt.s32.totalorder %s19, 1
        %s245 = scalar_select %p244, %s19, 1
        %p246 = scmp.lt.s32.totalorder %s21, 1
        %s247 = scalar_select %p246, %s21, 1
        %s248 = smul.addr %s245, 2
        %s249 = sadd.s32 %s247, %s248
        %s250 = smul.addr %s249, 4
        %s251 = scalar_lea.vmem %s1, %s250
      $region40: #{attention_pallas.1} parent=31 // pred_fallthru
        _
    $region32: #{attention_pallas.1} parent=5 // pred_fallthru
      _
    %p252 = scmp.le.s32.totalorder 1, %s12
    %p253 = scmp.lt.s32.totalorder %s12, 9
    %p254 = pnand %p252, %p253
    %p255 = pneg %p254
    // Predicated region
    $region41: #{attention_pallas.1} parent=5 // pred_check
      _
    $region42: #{attention_pallas.1} parent=5 // pred_check_branch
      %257 = sbr.rel (%p254) target = $region44
    $region43: #{attention_pallas.1} parent=5 // pred_region
      %s258 = ssub.s32 %s12, 1
      %p259 = scmp.lt.s32.totalorder %s22, 1
      %s260 = scalar_select %p259, %s22, 1
      %p261 = scmp.lt.s32.totalorder %s23, 1
      %s262 = scalar_select %p261, %s23, 1
      %s263 = smul.addr %s260, 2
      %s264 = sadd.s32 %s262, %s263
      %s265 = smul.addr %s264, 4
      %s266 = scalar_lea.vmem %s0, %s265
      %p267 = pneg %p59
      %p268 = pneg %p56
      %p269 = scmp.lt.s32.totalorder %s22, 1
      %s270 = scalar_select %p269, %s22, 1
      %p271 = scmp.lt.s32.totalorder %s24, 1
      %s272 = scalar_select %p271, %s24, 1
      %s273 = smul.addr %s270, 2
      %s274 = sadd.s32 %s272, %s273
      %s275 = smul.addr %s274, 4
      %s276 = scalar_lea.vmem %s1, %s275
      %p277 = pneg %p87
      %p278 = pneg %p84
      %p279 = pneg %p108
      %p280 = pneg %p105
      %p281 = pneg %p129
      %p282 = pneg %p126
      %p283 = pneg %p150
      %p284 = pneg %p147
      %p285 = pneg %p171
      %p286 = pneg %p168
      %p287 = pneg %p199
      %p288 = pneg %p196
      %p289 = scmp.lt.s32.totalorder %s22, 1
      %s290 = scalar_select %p289, %s22, 1
      %p291 = scmp.lt.s32.totalorder %s23, 1
      %s292 = scalar_select %p291, %s23, 1
      %s293 = smul.addr %s290, 2
      %s294 = sadd.s32 %s292, %s293
      %s295 = smul.addr %s294, 4
      %s296 = scalar_lea.vmem %s6, %s295
      %p297 = scmp.lt.s32.totalorder %s22, 1
      %s298 = scalar_select %p297, %s22, 1
      %p299 = scmp.lt.s32.totalorder %s23, 1
      %s300 = scalar_select %p299, %s23, 1
      %s301 = smul.addr %s298, 2
      %s302 = sadd.s32 %s300, %s301
      %s303 = smul.addr %s302, 4
      %s304 = scalar_lea.vmem %s0, %s303
      %p305 = scmp.lt.s32.totalorder %s22, 1
      %s306 = scalar_select %p305, %s22, 1
      %p307 = scmp.lt.s32.totalorder %s24, 1
      %s308 = scalar_select %p307, %s24, 1
      %s309 = smul.addr %s306, 2
      %s310 = sadd.s32 %s308, %s309
      %s311 = smul.addr %s310, 4
      %s312 = scalar_lea.vmem %s1, %s311
      %p313 = scmp.lt.s32.totalorder %s22, 1
      %s314 = scalar_select %p313, %s22, 1
      %p315 = scmp.lt.s32.totalorder %s23, 1
      %s316 = scalar_select %p315, %s23, 1
      %s317 = smul.addr %s314, 2
      %s318 = sadd.s32 %s316, %s317
      %s319 = smul.addr %s318, 4
      %s320 = scalar_lea.vmem %s6, %s319
      %p321 = scmp.eq.s32.totalorder %s24, 0
      // Predicated region
      $region45: #{attention_pallas.1} parent=43 // pred_check
        %p322 = pneg %p321
      $region46: #{attention_pallas.1} parent=43 // pred_check_branch
        %324 = sbr.rel (%p322) target = $region48
      $region47: #{attention_pallas.1} parent=43 // pred_region
        %325 = vst [vmem:[#allocation2] sm:$0x1] -inf
        %326 = vst [vmem:[#allocation3] sm:$0x1] 0.0
        %327 = vst [vmem:[#allocation4] sm:$0xf] 0.0
      $region48: #{attention_pallas.1} parent=43 // pred_fallthru
        _
      %v328 = vld [vmem:[%s304] sm:$0xf]
      %v329 = vld [vmem:[%s312] sm:$0xf]
      %v330 = vld [vmem:[%s2] sm:$0xf]
      %v331 = vld [vmem:[%s3] sm:$0xf]
      %333 = vset.pattern.permute.xlu0 0
      %334 = vperm.xlu0 %333, %v331
      %v335 = vpop.permute.xlu0 %334
      %vm337 = vcmask 31744
      %v339 = vsel %vm337, %v330, 0
      %vm341 = vcmask 1043456
      %v343 = vsel %vm341, %v328, 0
      %345 = vmatpush.msra.mxu0 0.0
      %346 = vmatpush.msra.mxu0 0.0
      %347 = vmatpush.msra.mxu0 0.0
      %348 = vmatpush.msra.mxu0 0.0
      %349 = vmatpush.msra.mxu0 0.0
      %350 = vmatpush.msra.mxu0 0.0
      %351 = vmatpush.msra.mxu0 0.0
      %352 = vmatpush.msra.mxu0 0.0
      %353 = vmatpush.msra.mxu0 0.0
      %354 = vmatpush.msra.mxu0 0.0
      %355 = vmatpush.msra.mxu0 0.0
      %356 = vmatpush.msra.mxu0 0.0
      %357 = vmatpush.msra.mxu0 0.0
      %358 = vmatpush.msra.mxu0 0.0
      %359 = vmatpush.msra.mxu0 0.0
      %360 = vmatpush.msra.mxu0 %v343
      %361 = vmatmul.f32.gmra.mxu0 %v339
      %v362 = vpop.f32.mrf.mxu0
      %v363 = vadd.f32 %v335, %v362
      %364 = vdwg.mxu0
      %v365 = vld [vmem:[%s4] sm:$0xff]
      %v366 = vld [vmem:[%s5] sm:$0xff]
      %368 = vset.pattern.permute.xlu0 0
      %369 = vperm.xlu0 %368, %v366
      %v370 = vpop.permute.xlu0 %369
      %v373 = vsel %vm337, %v365, 0
      %v376 = vsel %vm341, %v329, 0
      %378 = vmatpush.msra.mxu0 0.0
      %379 = vmatpush.msra.mxu0 0.0
      %380 = vmatpush.msra.mxu0 0.0
      %381 = vmatpush.msra.mxu0 0.0
      %382 = vmatpush.msra.mxu0 0.0
      %383 = vmatpush.msra.mxu0 0.0
      %384 = vmatpush.msra.mxu0 0.0
      %385 = vmatpush.msra.mxu0 0.0
      %386 = vmatpush.msra.mxu0 0.0
      %387 = vmatpush.msra.mxu0 0.0
      %388 = vmatpush.msra.mxu0 0.0
      %389 = vmatpush.msra.mxu0 0.0
      %390 = vmatpush.msra.mxu0 0.0
      %391 = vmatpush.msra.mxu0 0.0
      %392 = vmatpush.msra.mxu0 0.0
      %393 = vmatpush.msra.mxu0 %v376
      %394 = vmatmul.f32.gmra.mxu0 %v373
      %v395 = vpop.f32.mrf.mxu0
      %v396 = vadd.f32 %v370, %v395
      %397 = vdwg.mxu0
      %398 = vxpose.xlu0.b32.start [1/16] %v396, 128
      %399 = vxpose.xlu0.b32.cont [2/16] 0.0, 128
      %400 = vxpose.xlu0.b32.cont [3/16] 0.0, 128
      %401 = vxpose.xlu0.b32.cont [4/16] 0.0, 128
      %402 = vxpose.xlu0.b32.cont [5/16] 0.0, 128
      %403 = vxpose.xlu0.b32.cont [6/16] 0.0, 128
      %404 = vxpose.xlu0.b32.cont [7/16] 0.0, 128
      %405 = vxpose.xlu0.b32.cont [8/16] 0.0, 128
      %406 = vxpose.xlu0.b32.cont [9/16] 0.0, 128
      %407 = vxpose.xlu0.b32.cont [10/16] 0.0, 128
      %408 = vxpose.xlu0.b32.cont [11/16] 0.0, 128
      %409 = vxpose.xlu0.b32.cont [12/16] 0.0, 128
      %410 = vxpose.xlu0.b32.cont [13/16] 0.0, 128
      %411 = vxpose.xlu0.b32.cont [14/16] 0.0, 128
      %412 = vxpose.xlu0.b32.cont [15/16] 0.0, 128
      %413 = vxpose.xlu0.b32.end [16/16] 0.0, 128
      %v414 = vpop.trf.xlu0
      %v415 = vpop.trf.xlu0
      %v416 = vpop.trf.xlu0
      %v417 = vpop.trf.xlu0
      %v418 = vpop.trf.xlu0
      %v419 = vpop.trf.xlu0
      %v420 = vpop.trf.xlu0
      %v421 = vpop.trf.xlu0
      %v422 = vpop.trf.xlu0
      %v423 = vpop.trf.xlu0
      %v424 = vpop.trf.xlu0
      %v425 = vpop.trf.xlu0
      %v426 = vpop.trf.xlu0
      %v427 = vpop.trf.xlu0
      %v428 = vpop.trf.xlu0
      %v429 = vpop.trf.xlu0
      %v431 = vsel %vm337, %v414, 0
      %v434 = vsel %vm337, %v415, 0
      %v437 = vsel %vm337, %v416, 0
      %v440 = vsel %vm337, %v417, 0
      %v443 = vsel %vm337, %v418, 0
      %v446 = vsel %vm337, %v419, 0
      %v449 = vsel %vm337, %v420, 0
      %v452 = vsel %vm337, %v421, 0
      %v455 = vsel %vm337, %v422, 0
      %v458 = vsel %vm337, %v423, 0
      %v461 = vsel %vm337, %v424, 0
      %v464 = vsel %vm337, %v425, 0
      %v467 = vsel %vm337, %v426, 0
      %v470 = vsel %vm337, %v427, 0
      %v473 = vsel %vm337, %v428, 0
      %v476 = vsel %vm337, %v429, 0
      %v479 = vsel %vm341, %v363, 0
      %481 = vmatpush.msra.mxu0 0.0
      %482 = vmatpush.msra.mxu0 0.0
      %483 = vmatpush.msra.mxu0 0.0
      %484 = vmatpush.msra.mxu0 0.0
      %485 = vmatpush.msra.mxu0 0.0
      %486 = vmatpush.msra.mxu0 0.0
      %487 = vmatpush.msra.mxu0 0.0
      %488 = vmatpush.msra.mxu0 0.0
      %489 = vmatpush.msra.mxu0 0.0
      %490 = vmatpush.msra.mxu0 0.0
      %491 = vmatpush.msra.mxu0 0.0
      %492 = vmatpush.msra.mxu0 0.0
      %493 = vmatpush.msra.mxu0 0.0
      %494 = vmatpush.msra.mxu0 0.0
      %495 = vmatpush.msra.mxu0 0.0
      %496 = vmatpush.msra.mxu0 %v479
      %497 = vmatmul.f32.gmra.mxu0 %v431
      %v498 = vpop.f32.mrf.mxu0
      %v499 = vadd.f32 0.0, %v498
      %500 = vmatmul.f32.gmra.mxu0 %v434
      %v501 = vpop.f32.mrf.mxu0
      %v502 = vadd.f32 0.0, %v501
      %503 = vmatmul.f32.gmra.mxu0 %v437
      %v504 = vpop.f32.mrf.mxu0
      %v505 = vadd.f32 0.0, %v504
      %506 = vmatmul.f32.gmra.mxu0 %v440
      %v507 = vpop.f32.mrf.mxu0
      %v508 = vadd.f32 0.0, %v507
      %509 = vmatmul.f32.gmra.mxu0 %v443
      %v510 = vpop.f32.mrf.mxu0
      %v511 = vadd.f32 0.0, %v510
      %512 = vmatmul.f32.gmra.mxu0 %v446
      %v513 = vpop.f32.mrf.mxu0
      %v514 = vadd.f32 0.0, %v513
      %515 = vmatmul.f32.gmra.mxu0 %v449
      %v516 = vpop.f32.mrf.mxu0
      %v517 = vadd.f32 0.0, %v516
      %518 = vmatmul.f32.gmra.mxu0 %v452
      %v519 = vpop.f32.mrf.mxu0
      %v520 = vadd.f32 0.0, %v519
      %521 = vmatmul.f32.gmra.mxu0 %v455
      %v522 = vpop.f32.mrf.mxu0
      %v523 = vadd.f32 0.0, %v522
      %524 = vmatmul.f32.gmra.mxu0 %v458
      %v525 = vpop.f32.mrf.mxu0
      %v526 = vadd.f32 0.0, %v525
      %527 = vmatmul.f32.gmra.mxu0 %v461
      %v528 = vpop.f32.mrf.mxu0
      %v529 = vadd.f32 0.0, %v528
      %530 = vmatmul.f32.gmra.mxu0 %v464
      %v531 = vpop.f32.mrf.mxu0
      %v532 = vadd.f32 0.0, %v531
      %533 = vmatmul.f32.gmra.mxu0 %v467
      %v534 = vpop.f32.mrf.mxu0
      %v535 = vadd.f32 0.0, %v534
      %536 = vmatmul.f32.gmra.mxu0 %v470
      %v537 = vpop.f32.mrf.mxu0
      %v538 = vadd.f32 0.0, %v537
      %539 = vmatmul.f32.gmra.mxu0 %v473
      %v540 = vpop.f32.mrf.mxu0
      %v541 = vadd.f32 0.0, %v540
      %542 = vmatmul.f32.gmra.mxu0 %v476
      %v543 = vpop.f32.mrf.mxu0
      %v544 = vadd.f32 0.0, %v543
      %545 = vdwg.mxu0
      %v546 = vld [vmem:[#allocation2] sm:$0x1]
      %v547 = vmax.f32 %v499, %v511
      %v548 = vmax.f32 %v502, %v514
      %v549 = vmax.f32 %v505, %v517
      %v550 = vmax.f32 %v508, %v520
      %v551 = vmax.f32 %v547, %v523
      %v552 = vmax.f32 %v548, %v526
      %v553 = vmax.f32 %v549, %v529
      %v554 = vmax.f32 %v550, %v532
      %v555 = vmax.f32 %v551, %v535
      %v556 = vmax.f32 %v552, %v538
      %v557 = vmax.f32 %v553, %v541
      %v558 = vmax.f32 %v554, %v544
      %v559 = vmax.f32 %v555, %v556
      %v560 = vmax.f32 %v557, %v558
      %v561 = vmax.f32 %v559, %v560
      %v562 = vrot.slane %v561, 4
      %v563 = vmax.f32 %v561, %v562
      %v564 = vrot.slane %v563, 2
      %v565 = vmax.f32 %v563, %v564
      %v566 = vrot.slane %v565, 1
      %v567 = vmax.f32 %v565, %v566
      %v568 = vmax.f32 %v546, %v567
      %v569 = vsub.f32 %v546, %v568
      %v570 = vmul.f32 %v569, 1.442695
      %v571 = vpow.pop %v570
      %v573 = vperm.slane %v568, 0
      %v575 = vsub.f32 %v499, %v573
      %v576 = vsub.f32 %v502, %v573
      %v577 = vsub.f32 %v505, %v573
      %v578 = vsub.f32 %v508, %v573
      %v579 = vsub.f32 %v511, %v573
      %v580 = vsub.f32 %v514, %v573
      %v581 = vsub.f32 %v517, %v573
      %v582 = vsub.f32 %v520, %v573
      %v583 = vsub.f32 %v523, %v573
      %v584 = vsub.f32 %v526, %v573
      %v585 = vsub.f32 %v529, %v573
      %v586 = vsub.f32 %v532, %v573
      %v587 = vsub.f32 %v535, %v573
      %v588 = vsub.f32 %v538, %v573
      %v589 = vsub.f32 %v541, %v573
      %v590 = vsub.f32 %v544, %v573
      %v591 = vmul.f32 %v575, 1.442695
      %v592 = vpow.pop %v591
      %v593 = vmul.f32 %v576, 1.442695
      %v594 = vpow.pop %v593
      %v595 = vmul.f32 %v577, 1.442695
      %v596 = vpow.pop %v595
      %v597 = vmul.f32 %v578, 1.442695
      %v598 = vpow.pop %v597
      %v599 = vmul.f32 %v579, 1.442695
      %v600 = vpow.pop %v599
      %v601 = vmul.f32 %v580, 1.442695
      %v602 = vpow.pop %v601
      %v603 = vmul.f32 %v581, 1.442695
      %v604 = vpow.pop %v603
      %v605 = vmul.f32 %v582, 1.442695
      %v606 = vpow.pop %v605
      %v607 = vmul.f32 %v583, 1.442695
      %v608 = vpow.pop %v607
      %v609 = vmul.f32 %v584, 1.442695
      %v610 = vpow.pop %v609
      %v611 = vmul.f32 %v585, 1.442695
      %v612 = vpow.pop %v611
      %v613 = vmul.f32 %v586, 1.442695
      %v614 = vpow.pop %v613
      %v615 = vmul.f32 %v587, 1.442695
      %v616 = vpow.pop %v615
      %v617 = vmul.f32 %v588, 1.442695
      %v618 = vpow.pop %v617
      %v619 = vmul.f32 %v589, 1.442695
      %v620 = vpow.pop %v619
      %v621 = vmul.f32 %v590, 1.442695
      %v622 = vpow.pop %v621
      %v623 = vld [vmem:[#allocation3] sm:$0x1]
      %v624 = vmul.f32 %v571, %v623
      %v625 = vadd.f32 %v592, %v594
      %v626 = vadd.f32 %v625, %v596
      %v627 = vadd.f32 %v626, %v598
      %v628 = vadd.f32 %v627, %v600
      %v629 = vadd.f32 %v628, %v602
      %v630 = vadd.f32 %v629, %v604
      %v631 = vadd.f32 %v630, %v606
      %v632 = vadd.f32 %v631, %v608
      %v633 = vadd.f32 %v632, %v610
      %v634 = vadd.f32 %v633, %v612
      %v635 = vadd.f32 %v634, %v614
      %v636 = vadd.f32 %v635, %v616
      %v637 = vadd.f32 %v636, %v618
      %v638 = vadd.f32 %v637, %v620
      %v639 = vadd.f32 %v638, %v622
      %v640 = vrot.slane %v639, 4
      %v641 = vadd.f32 %v639, %v640
      %v642 = vrot.slane %v641, 2
      %v643 = vadd.f32 %v641, %v642
      %v644 = vrot.slane %v643, 1
      %v645 = vadd.f32 %v643, %v644
      %v646 = vadd.f32 %v624, %v645
      %647 = vst [vmem:[#allocation3] sm:$0x1] %v646
      %v648 = vld [vmem:[#allocation4] sm:$0xf]
      %v650 = vperm.slane %v571, 0
      %v652 = vmul.f32 %v650, %v648
      %v654 = vrot.slane %v396, 4
      %656 = vmatpush.msra.mxu0 %v622
      %657 = vmatpush.msra.mxu0 %v620
      %658 = vmatpush.msra.mxu0 %v618
      %659 = vmatpush.msra.mxu0 %v616
      %660 = vmatpush.msra.mxu0 %v614
      %661 = vmatpush.msra.mxu0 %v612
      %662 = vmatpush.msra.mxu0 %v610
      %663 = vmatpush.msra.mxu0 %v608
      %664 = vmatpush.msra.mxu0 %v606
      %665 = vmatpush.msra.mxu0 %v604
      %666 = vmatpush.msra.mxu0 %v602
      %667 = vmatpush.msra.mxu0 %v600
      %668 = vmatpush.msra.mxu0 %v598
      %669 = vmatpush.msra.mxu0 %v596
      %670 = vmatpush.msra.mxu0 %v594
      %671 = vmatpush.msra.mxu0 %v592
      %672 = vmatmul.f32.gmra.mxu0 %v654
      %v673 = vpop.f32.mrf.mxu0
      %v674 = vadd.f32 0.0, %v673
      %675 = vdwg.mxu0
      %v676 = vadd.f32 %v652, %v674
      %677 = vst [vmem:[#allocation4] sm:$0xf] %v676
      %678 = vst [vmem:[#allocation2] sm:$0x1] %v568
      %p679 = scmp.eq.s32.totalorder %s24, 1
      // Predicated region
      $region49: #{attention_pallas.1} parent=43 // pred_check
        %p680 = pneg %p679
      $region50: #{attention_pallas.1} parent=43 // pred_check_branch
        %682 = sbr.rel (%p680) target = $region52
      $region51: #{attention_pallas.1} parent=43 // pred_region
        %v683 = vld [vmem:[#allocation3] sm:$0x1]
        %v684 = vrcp.pop %v683
        %v685 = vld [vmem:[#allocation4] sm:$0xf]
        %v687 = vperm.slane %v684, 0
        %v689 = vmul.f32 %v685, %v687
        %690 = vst [vmem:[%s320] sm:$0xf] %v689
      $region52: #{attention_pallas.1} parent=43 // pred_fallthru
        _
      %p691 = scmp.lt.s32.totalorder %s22, 1
      %s692 = scalar_select %p691, %s22, 1
      %p693 = scmp.lt.s32.totalorder %s23, 1
      %s694 = scalar_select %p693, %s23, 1
      %s695 = smul.addr %s692, 2
      %s696 = sadd.s32 %s694, %s695
      %s697 = smul.addr %s696, 4
      %s698 = scalar_lea.vmem %s6, %s697
      // Predicated region
      $region53: #{attention_pallas.1} parent=43 // pred_check
        %p699 = pneg %p196
      $region54: #{attention_pallas.1} parent=43 // pred_check_branch
        %701 = sbr.rel (%p699) target = $region56
      $region55: #{attention_pallas.1} parent=43 // pred_region
        _
      $region56: #{attention_pallas.1} parent=43 // pred_fallthru
        _
    $region44: #{attention_pallas.1} parent=5 // pred_fallthru
      _
    %p702 = scmp.le.s32.totalorder 2, %s12
    // Predicated region
    $region57: #{attention_pallas.1} parent=5 // pred_check
      %p703 = pneg %p702
    $region58: #{attention_pallas.1} parent=5 // pred_check_branch
      %705 = sbr.rel (%p703) target = $region60
    $region59: #{attention_pallas.1} parent=5 // pred_region
      %s706 = ssub.s32 %s12, 2
      // Predicated region
      $region61: #{attention_pallas.1} parent=59 // pred_check
        %p707 = pneg %p202
      $region62: #{attention_pallas.1} parent=59 // pred_check_branch
        %709 = sbr.rel (%p707) target = $region64
      $region63: #{attention_pallas.1} parent=59 // pred_region
        %p710 = scmp.lt.s32.totalorder %s25, 1
        %s711 = scalar_select %p710, %s25, 1
        %p712 = scmp.lt.s32.totalorder %s26, 1
        %s713 = scalar_select %p712, %s26, 1
        %s714 = smul.addr %s711, 2
        %s715 = sadd.s32 %s713, %s714
        %s716 = smul.addr %s715, 4
        %s717 = scalar_lea.vmem %s6, %s716
      $region64: #{attention_pallas.1} parent=59 // pred_fallthru
        _
    $region60: #{attention_pallas.1} parent=5 // pred_fallthru
      _
  $region6: #{attention_pallas.1} parent=0 // loop_footer
    %s16 = sadd.s32 1, %s12
  $region7: #{attention_pallas.1} parent=0 // loop_footer_branch
    %11 = sbr.rel target = $region3
  $region8: #{attention_pallas.1} parent=0 // loop_exit
    _

</llo_original>
